<compile_context>
chip_gen: v7x
topology: tpu7x:2x2x1
jax: 0.10.0
libtpu: 0.0.40
codegen_flags: <defaults>
</compile_context>

<pallas_src>
import functools

import jax
import jax.numpy as jnp
import numpy as np
from jax import lax
from jax.experimental import pallas as pl
from jax.experimental.pallas import tpu as pltpu


def _lstm_recurrent_kernel(gx_ref, whh_ref,          # inputs
                           out_ref, cn_ref,          # outputs
                           h_scr, c_scr,             # VMEM carry scratch
                           *, hidden, t_chunk, seq_len):
    """Processes one chunk of `t_chunk` timesteps of the LSTM recurrence."""
    chunk = pl.program_id(0)
    H = hidden

    @pl.when(chunk == 0)
    def _init():
        h_scr[...] = jnp.zeros_like(h_scr)
        c_scr[...] = jnp.zeros_like(c_scr)

    whh = whh_ref[...]                      # (H, 4H), resident across the grid
    needs_mask = (seq_len % t_chunk) != 0   # only a padded tail chunk needs it

    def step(i, carry):
        h, c = carry
        # Precomputed x-projection (+bias) plus ONE fused recurrent matmul.
        gates = gx_ref[i] + jnp.dot(h, whh, preferred_element_type=jnp.float32)
        # One sigmoid over the whole lane-dense (B, 4H) vreg: i/f/o fall out of
        # the same EUP push via static lane slicing (g's slice is discarded).
        sig = jax.nn.sigmoid(gates)
        i_g = sig[:, 0 * H:1 * H]
        f_g = sig[:, 1 * H:2 * H]
        o_g = sig[:, 3 * H:4 * H]
        g_g = jnp.tanh(gates[:, 2 * H:3 * H])
        c_new = f_g * c + i_g * g_g
        h_new = o_g * jnp.tanh(c_new)
        if needs_mask:   # freeze the carry on padded timesteps (static branch)
            valid = (chunk * t_chunk + i) < seq_len
            h_new = jnp.where(valid, h_new, h)
            c_new = jnp.where(valid, c_new, c)
        out_ref[i] = h_new.astype(out_ref.dtype)
        return (h_new, c_new)

    h_fin, c_fin = lax.fori_loop(0, t_chunk, step, (h_scr[...], c_scr[...]),
                                 unroll=(t_chunk <= 16))
    h_scr[...] = h_fin
    c_scr[...] = c_fin

    @pl.when(chunk == pl.num_programs(0) - 1)
    def _finalize():
        cn_ref[...] = c_fin.astype(cn_ref.dtype)


def protein_lstm_layer(inputs, w_ih, w_hh, b_ih, b_hh, dropout_p=0.0,
                       t_chunk=None):
    """Pallas implementation of ProteinLSTMLayer.forward.

    inputs: (B, T, D) batch-first, float32
    w_ih:   (4H, D)   PyTorch weight_ih_l0 (gate order i, f, g, o)
    w_hh:   (4H, H)   PyTorch weight_hh_l0
    b_ih, b_hh: (4H,)
    returns (output (B,T,H), (h_n (1,B,H), c_n (1,B,H)))
    """
    # Dropout with p=0.0 (module default) / eval mode is the identity.
    # TODO(synk): training-mode dropout with p>0 would need pltpu.prng_* masking.
    del dropout_p

    B, T, D = inputs.shape
    H = w_ih.shape[0] // 4

    # ---- Hoisted input projection: one big matmul, outside the recurrence ----
    w_ih_t = jnp.transpose(w_ih).astype(jnp.float32)          # (D, 4H)
    w_hh_t = jnp.transpose(w_hh).astype(jnp.float32)          # (H, 4H)
    bias = (b_ih + b_hh).astype(jnp.float32)                  # (4H,)

    x_tm = jnp.transpose(inputs, (1, 0, 2)).astype(jnp.float32)      # (T, B, D)
    gates_x = (jnp.dot(x_tm.reshape(T * B, D), w_ih_t,
                       preferred_element_type=jnp.float32)
               + bias).reshape(T, B, 4 * H)                   # (T, B, 4H)

    # ---- Time-chunked recurrent Pallas kernel ----
    if t_chunk is None:
        t_chunk = min(T, 128)
    num_chunks = pl.cdiv(T, t_chunk)
    t_pad = num_chunks * t_chunk
    if t_pad != T:
        gates_x = jnp.pad(gates_x, ((0, t_pad - T), (0, 0), (0, 0)))

    kernel = functools.partial(_lstm_recurrent_kernel,
                               hidden=H, t_chunk=t_chunk, seq_len=T)

    out_tm, c_n = pl.pallas_call(
        kernel,
        out_shape=(
            jax.ShapeDtypeStruct((t_pad, B, H), jnp.float32),
            jax.ShapeDtypeStruct((B, H), jnp.float32),
        ),
        grid_spec=pltpu.PrefetchScalarGridSpec(
            num_scalar_prefetch=0,
            grid=(num_chunks,),
            in_specs=[
                # precomputed gate pre-activations, one slab per chunk
                pl.BlockSpec((t_chunk, B, 4 * H), lambda c: (c, 0, 0)),
                # W_hh, resident (constant index_map)
                pl.BlockSpec((H, 4 * H), lambda c: (0, 0)),
            ],
            out_specs=[
                pl.BlockSpec((t_chunk, B, H), lambda c: (c, 0, 0)),   # h sequence slab
                pl.BlockSpec((B, H), lambda c: (0, 0)),               # c_n (resident)
            ],
            scratch_shapes=[
                pltpu.VMEM((B, H), jnp.float32),   # h carry across chunks
                pltpu.VMEM((B, H), jnp.float32),   # c carry across chunks
            ],
        ),
        compiler_params=pltpu.CompilerParams(
            dimension_semantics=("arbitrary",),    # recurrence is sequential
        ),
    )(gates_x, w_hh_t)

    output = jnp.transpose(out_tm[:T], (1, 0, 2))             # (B, T, H)
    h_n = output[:, -1]                                       # final hidden state
    return output, (h_n[None], c_n[None])


def _lstm_reference(inputs, w_ih, w_hh, b_ih, b_hh):
    """Pure-JAX reference (lax.scan) of PyTorch single-layer LSTM, batch_first."""
    B, T, D = inputs.shape
    H = w_ih.shape[0] // 4
    b = b_ih + b_hh

    def step(carry, x_t):
        h, c = carry
        gates = x_t @ w_ih.T + h @ w_hh.T + b          # (B, 4H)
        i = jax.nn.sigmoid(gates[:, 0 * H:1 * H])
        f = jax.nn.sigmoid(gates[:, 1 * H:2 * H])
        g = jnp.tanh(gates[:, 2 * H:3 * H])
        o = jax.nn.sigmoid(gates[:, 3 * H:4 * H])
        c_new = f * c + i * g
        h_new = o * jnp.tanh(c_new)
        return (h_new, c_new), h_new

    h0 = jnp.zeros((B, H), jnp.float32)
    c0 = jnp.zeros((B, H), jnp.float32)
    (h_n, c_n), out = lax.scan(step, (h0, c0), jnp.transpose(inputs, (1, 0, 2)))
    return jnp.transpose(out, (1, 0, 2)), (h_n[None], c_n[None])


if __name__ == "__main__":
    B, T, D, H = 2, 8, 16, 32   # batch, seq, input_size, hidden_size

    key = jax.random.PRNGKey(0)
    k_x, k1, k2, k3, k4 = jax.random.split(key, 5)

    # PyTorch LSTM init: U(-1/sqrt(H), 1/sqrt(H)) for all params.
    bound = 1.0 / np.sqrt(H)
    x = jax.random.normal(k_x, (B, T, D), dtype=jnp.float32)
    w_ih = jax.random.uniform(k1, (4 * H, D), jnp.float32, -bound, bound)
    w_hh = jax.random.uniform(k2, (4 * H, H), jnp.float32, -bound, bound)
    b_ih = jax.random.uniform(k3, (4 * H,), jnp.float32, -bound, bound)
    b_hh = jax.random.uniform(k4, (4 * H,), jnp.float32, -bound, bound)

    lstm_fn = jax.jit(protein_lstm_layer)
    out, (h_n, c_n) = jax.block_until_ready(
        lstm_fn(x, w_ih, w_hh, b_ih, b_hh))

    out_ref, (h_ref, c_ref) = _lstm_reference(x, w_ih, w_hh, b_ih, b_hh)

    assert out.shape == (B, T, H) and h_n.shape == (1, B, H) and c_n.shape == (1, B, H)
    np.testing.assert_allclose(np.asarray(out), np.asarray(out_ref), atol=1e-5, rtol=1e-5)
    np.testing.assert_allclose(np.asarray(h_n), np.asarray(h_ref), atol=1e-5, rtol=1e-5)
    np.testing.assert_allclose(np.asarray(c_n), np.asarray(c_ref), atol=1e-5, rtol=1e-5)

    print("KERNEL_OK")
</pallas_src>

<mosaic_0001>
module attributes {stable_mosaic.version = 11 : i64} {
  func.func @_lstm_recurrent_kernel(%arg0: i32, %arg1: memref<8x2x128xf32, #tpu.memory_space<vmem>>, %arg2: memref<32x128xf32, #tpu.memory_space<vmem>>, %arg3: memref<8x2x32xf32, #tpu.memory_space<vmem>>, %arg4: memref<2x32xf32, #tpu.memory_space<vmem>>, %arg5: memref<2x32xf32, #tpu.memory_space<vmem>>, %arg6: memref<2x32xf32, #tpu.memory_space<vmem>>) attributes {dimension_semantics = [#tpu.dimension_semantics<arbitrary>], iteration_bounds = array<i64: 1>, scalar_prefetch = 0 : i64, scratch_operands = 2 : i64, tpu.core_type = #tpu.core_type<tc>, window_params = [{transform_indices = @transform_0, window_bounds = array<i64: 8, 2, 128>}, {pipeline_mode = #tpu.pipeline_mode<synchronous>, transform_indices = @transform_1, window_bounds = array<i64: 32, 128>}, {transform_indices = @transform_2, window_bounds = array<i64: 8, 2, 32>}, {pipeline_mode = #tpu.pipeline_mode<synchronous>, transform_indices = @transform_3, window_bounds = array<i64: 2, 32>}]} {
    %c0_i32 = arith.constant 0 : i32
    %0 = arith.cmpi eq, %arg0, %c0_i32 : i32
    %1 = arith.extui %0 : i1 to i32
    %c0_i32_0 = arith.constant 0 : i32
    %2 = arith.cmpi ne, %1, %c0_i32_0 : i32
    scf.if %2 {
      %cst_60 = arith.constant 0.000000e+00 : f32
      %203 = vector.broadcast %cst_60 : f32 to vector<2x32xf32>
      %c0_61 = arith.constant 0 : index
      %c0_62 = arith.constant 0 : index
      %204 = vector.load %arg5[%c0_61, %c0_62] : memref<2x32xf32, #tpu.memory_space<vmem>>, vector<2x32xf32>
      tpu.vector_store %arg5[%c0_61, %c0_62], %203 {strides = array<i32>} : memref<2x32xf32, #tpu.memory_space<vmem>>, vector<2x32xf32>,
      %cst_63 = arith.constant 0.000000e+00 : f32
      %205 = vector.broadcast %cst_63 : f32 to vector<2x32xf32>
      %c0_64 = arith.constant 0 : index
      %c0_65 = arith.constant 0 : index
      %206 = vector.load %arg6[%c0_64, %c0_65] : memref<2x32xf32, #tpu.memory_space<vmem>>, vector<2x32xf32>
      tpu.vector_store %arg6[%c0_64, %c0_65], %205 {strides = array<i32>} : memref<2x32xf32, #tpu.memory_space<vmem>>, vector<2x32xf32>,
    } else {
    }
    %c0 = arith.constant 0 : index
    %c0_1 = arith.constant 0 : index
    %3 = vector.load %arg2[%c0, %c0_1] : memref<32x128xf32, #tpu.memory_space<vmem>>, vector<32x128xf32>
    %c0_2 = arith.constant 0 : index
    %c0_3 = arith.constant 0 : index
    %4 = vector.load %arg5[%c0_2, %c0_3] : memref<2x32xf32, #tpu.memory_space<vmem>>, vector<2x32xf32>
    %c0_4 = arith.constant 0 : index
    %c0_5 = arith.constant 0 : index
    %5 = vector.load %arg6[%c0_4, %c0_5] : memref<2x32xf32, #tpu.memory_space<vmem>>, vector<2x32xf32>
    %c0_i32_6 = arith.constant 0 : i32
    %6 = arith.index_cast %c0_i32_6 : i32 to index
    %c0_7 = arith.constant 0 : index
    %c0_8 = arith.constant 0 : index
    %7 = vector.load %arg1[%6, %c0_7, %c0_8] : memref<8x2x128xf32, #tpu.memory_space<vmem>>, vector<1x2x128xf32>
    %8 = vector.shape_cast %7 : vector<1x2x128xf32> to vector<2x128xf32>
    %cst = arith.constant dense<0.000000e+00> : vector<2x128xf32>
    %9 = tpu.matmul %4, %3, %cst {dimension_numbers = #tpu.dot_dimension_numbers<[1], [0], [0], [1], [0, 0, 1, 1], [], []>} : vector<2x32xf32>, vector<32x128xf32>, vector<2x128xf32> -> vector<2x128xf32>
    %10 = arith.addf %8, %9 : vector<2x128xf32>
    %11 = arith.negf %10 : vector<2x128xf32>
    %12 = math.exp %11 : vector<2x128xf32>
    %cst_9 = arith.constant 1.000000e+00 : f32
    %13 = vector.broadcast %cst_9 : f32 to vector<2x128xf32>
    %14 = arith.addf %13, %12 : vector<2x128xf32>
    %15 = arith.divf %13, %14 : vector<2x128xf32>
    %16 = vector.extract_strided_slice %15 {offsets = [0, 0], sizes = [2, 32], strides = [1, 1]} : vector<2x128xf32> to vector<2x32xf32>
    %17 = vector.extract_strided_slice %15 {offsets = [0, 32], sizes = [2, 32], strides = [1, 1]} : vector<2x128xf32> to vector<2x32xf32>
    %18 = vector.extract_strided_slice %15 {offsets = [0, 96], sizes = [2, 32], strides = [1, 1]} : vector<2x128xf32> to vector<2x32xf32>
    %19 = vector.extract_strided_slice %10 {offsets = [0, 64], sizes = [2, 32], strides = [1, 1]} : vector<2x128xf32> to vector<2x32xf32>
    %20 = math.tanh %19 : vector<2x32xf32>
    %21 = arith.mulf %17, %5 : vector<2x32xf32>
    %22 = arith.mulf %16, %20 : vector<2x32xf32>
    %23 = arith.addf %21, %22 : vector<2x32xf32>
    %24 = math.tanh %23 : vector<2x32xf32>
    %25 = arith.mulf %18, %24 : vector<2x32xf32>
    %26 = arith.index_cast %c0_i32_6 : i32 to index
    %c0_10 = arith.constant 0 : index
    %c0_11 = arith.constant 0 : index
    %27 = vector.load %arg3[%26, %c0_10, %c0_11] : memref<8x2x32xf32, #tpu.memory_space<vmem>>, vector<1x2x32xf32>
    %28 = vector.shape_cast %27 : vector<1x2x32xf32> to vector<2x32xf32>
    %29 = vector.shape_cast %25 : vector<2x32xf32> to vector<1x2x32xf32>
    tpu.vector_store %arg3[%26, %c0_10, %c0_11], %29 {strides = array<i32>} : memref<8x2x32xf32, #tpu.memory_space<vmem>>, vector<1x2x32xf32>,
    %c1_i32 = arith.constant 1 : i32
    %30 = arith.index_cast %c1_i32 : i32 to index
    %c0_12 = arith.constant 0 : index
    %c0_13 = arith.constant 0 : index
    %31 = vector.load %arg1[%30, %c0_12, %c0_13] : memref<8x2x128xf32, #tpu.memory_space<vmem>>, vector<1x2x128xf32>
    %32 = vector.shape_cast %31 : vector<1x2x128xf32> to vector<2x128xf32>
    %cst_14 = arith.constant dense<0.000000e+00> : vector<2x128xf32>
    %33 = tpu.matmul %25, %3, %cst_14 {dimension_numbers = #tpu.dot_dimension_numbers<[1], [0], [0], [1], [0, 0, 1, 1], [], []>} : vector<2x32xf32>, vector<32x128xf32>, vector<2x128xf32> -> vector<2x128xf32>
    %34 = arith.addf %32, %33 : vector<2x128xf32>
    %35 = arith.negf %34 : vector<2x128xf32>
    %36 = math.exp %35 : vector<2x128xf32>
    %cst_15 = arith.constant 1.000000e+00 : f32
    %37 = vector.broadcast %cst_15 : f32 to vector<2x128xf32>
    %38 = arith.addf %37, %36 : vector<2x128xf32>
    %39 = arith.divf %37, %38 : vector<2x128xf32>
    %40 = vector.extract_strided_slice %39 {offsets = [0, 0], sizes = [2, 32], strides = [1, 1]} : vector<2x128xf32> to vector<2x32xf32>
    %41 = vector.extract_strided_slice %39 {offsets = [0, 32], sizes = [2, 32], strides = [1, 1]} : vector<2x128xf32> to vector<2x32xf32>
    %42 = vector.extract_strided_slice %39 {offsets = [0, 96], sizes = [2, 32], strides = [1, 1]} : vector<2x128xf32> to vector<2x32xf32>
    %43 = vector.extract_strided_slice %34 {offsets = [0, 64], sizes = [2, 32], strides = [1, 1]} : vector<2x128xf32> to vector<2x32xf32>
    %44 = math.tanh %43 : vector<2x32xf32>
    %45 = arith.mulf %41, %23 : vector<2x32xf32>
    %46 = arith.mulf %40, %44 : vector<2x32xf32>
    %47 = arith.addf %45, %46 : vector<2x32xf32>
    %48 = math.tanh %47 : vector<2x32xf32>
    %49 = arith.mulf %42, %48 : vector<2x32xf32>
    %50 = arith.index_cast %c1_i32 : i32 to index
    %c0_16 = arith.constant 0 : index
    %c0_17 = arith.constant 0 : index
    %51 = vector.load %arg3[%50, %c0_16, %c0_17] : memref<8x2x32xf32, #tpu.memory_space<vmem>>, vector<1x2x32xf32>
    %52 = vector.shape_cast %51 : vector<1x2x32xf32> to vector<2x32xf32>
    %53 = vector.shape_cast %49 : vector<2x32xf32> to vector<1x2x32xf32>
    tpu.vector_store %arg3[%50, %c0_16, %c0_17], %53 {strides = array<i32>} : memref<8x2x32xf32, #tpu.memory_space<vmem>>, vector<1x2x32xf32>,
    %c2_i32 = arith.constant 2 : i32
    %54 = arith.index_cast %c2_i32 : i32 to index
    %c0_18 = arith.constant 0 : index
    %c0_19 = arith.constant 0 : index
    %55 = vector.load %arg1[%54, %c0_18, %c0_19] : memref<8x2x128xf32, #tpu.memory_space<vmem>>, vector<1x2x128xf32>
    %56 = vector.shape_cast %55 : vector<1x2x128xf32> to vector<2x128xf32>
    %cst_20 = arith.constant dense<0.000000e+00> : vector<2x128xf32>
    %57 = tpu.matmul %49, %3, %cst_20 {dimension_numbers = #tpu.dot_dimension_numbers<[1], [0], [0], [1], [0, 0, 1, 1], [], []>} : vector<2x32xf32>, vector<32x128xf32>, vector<2x128xf32> -> vector<2x128xf32>
    %58 = arith.addf %56, %57 : vector<2x128xf32>
    %59 = arith.negf %58 : vector<2x128xf32>
    %60 = math.exp %59 : vector<2x128xf32>
    %cst_21 = arith.constant 1.000000e+00 : f32
    %61 = vector.broadcast %cst_21 : f32 to vector<2x128xf32>
    %62 = arith.addf %61, %60 : vector<2x128xf32>
    %63 = arith.divf %61, %62 : vector<2x128xf32>
    %64 = vector.extract_strided_slice %63 {offsets = [0, 0], sizes = [2, 32], strides = [1, 1]} : vector<2x128xf32> to vector<2x32xf32>
    %65 = vector.extract_strided_slice %63 {offsets = [0, 32], sizes = [2, 32], strides = [1, 1]} : vector<2x128xf32> to vector<2x32xf32>
    %66 = vector.extract_strided_slice %63 {offsets = [0, 96], sizes = [2, 32], strides = [1, 1]} : vector<2x128xf32> to vector<2x32xf32>
    %67 = vector.extract_strided_slice %58 {offsets = [0, 64], sizes = [2, 32], strides = [1, 1]} : vector<2x128xf32> to vector<2x32xf32>
    %68 = math.tanh %67 : vector<2x32xf32>
    %69 = arith.mulf %65, %47 : vector<2x32xf32>
    %70 = arith.mulf %64, %68 : vector<2x32xf32>
    %71 = arith.addf %69, %70 : vector<2x32xf32>
    %72 = math.tanh %71 : vector<2x32xf32>
    %73 = arith.mulf %66, %72 : vector<2x32xf32>
    %74 = arith.index_cast %c2_i32 : i32 to index
    %c0_22 = arith.constant 0 : index
    %c0_23 = arith.constant 0 : index
    %75 = vector.load %arg3[%74, %c0_22, %c0_23] : memref<8x2x32xf32, #tpu.memory_space<vmem>>, vector<1x2x32xf32>
    %76 = vector.shape_cast %75 : vector<1x2x32xf32> to vector<2x32xf32>
    %77 = vector.shape_cast %73 : vector<2x32xf32> to vector<1x2x32xf32>
    tpu.vector_store %arg3[%74, %c0_22, %c0_23], %77 {strides = array<i32>} : memref<8x2x32xf32, #tpu.memory_space<vmem>>, vector<1x2x32xf32>,
    %c3_i32 = arith.constant 3 : i32
    %78 = arith.index_cast %c3_i32 : i32 to index
    %c0_24 = arith.constant 0 : index
    %c0_25 = arith.constant 0 : index
    %79 = vector.load %arg1[%78, %c0_24, %c0_25] : memref<8x2x128xf32, #tpu.memory_space<vmem>>, vector<1x2x128xf32>
    %80 = vector.shape_cast %79 : vector<1x2x128xf32> to vector<2x128xf32>
    %cst_26 = arith.constant dense<0.000000e+00> : vector<2x128xf32>
    %81 = tpu.matmul %73, %3, %cst_26 {dimension_numbers = #tpu.dot_dimension_numbers<[1], [0], [0], [1], [0, 0, 1, 1], [], []>} : vector<2x32xf32>, vector<32x128xf32>, vector<2x128xf32> -> vector<2x128xf32>
    %82 = arith.addf %80, %81 : vector<2x128xf32>
    %83 = arith.negf %82 : vector<2x128xf32>
    %84 = math.exp %83 : vector<2x128xf32>
    %cst_27 = arith.constant 1.000000e+00 : f32
    %85 = vector.broadcast %cst_27 : f32 to vector<2x128xf32>
    %86 = arith.addf %85, %84 : vector<2x128xf32>
    %87 = arith.divf %85, %86 : vector<2x128xf32>
    %88 = vector.extract_strided_slice %87 {offsets = [0, 0], sizes = [2, 32], strides = [1, 1]} : vector<2x128xf32> to vector<2x32xf32>
    %89 = vector.extract_strided_slice %87 {offsets = [0, 32], sizes = [2, 32], strides = [1, 1]} : vector<2x128xf32> to vector<2x32xf32>
    %90 = vector.extract_strided_slice %87 {offsets = [0, 96], sizes = [2, 32], strides = [1, 1]} : vector<2x128xf32> to vector<2x32xf32>
    %91 = vector.extract_strided_slice %82 {offsets = [0, 64], sizes = [2, 32], strides = [1, 1]} : vector<2x128xf32> to vector<2x32xf32>
    %92 = math.tanh %91 : vector<2x32xf32>
    %93 = arith.mulf %89, %71 : vector<2x32xf32>
    %94 = arith.mulf %88, %92 : vector<2x32xf32>
    %95 = arith.addf %93, %94 : vector<2x32xf32>
    %96 = math.tanh %95 : vector<2x32xf32>
    %97 = arith.mulf %90, %96 : vector<2x32xf32>
    %98 = arith.index_cast %c3_i32 : i32 to index
    %c0_28 = arith.constant 0 : index
    %c0_29 = arith.constant 0 : index
    %99 = vector.load %arg3[%98, %c0_28, %c0_29] : memref<8x2x32xf32, #tpu.memory_space<vmem>>, vector<1x2x32xf32>
    %100 = vector.shape_cast %99 : vector<1x2x32xf32> to vector<2x32xf32>
    %101 = vector.shape_cast %97 : vector<2x32xf32> to vector<1x2x32xf32>
    tpu.vector_store %arg3[%98, %c0_28, %c0_29], %101 {strides = array<i32>} : memref<8x2x32xf32, #tpu.memory_space<vmem>>, vector<1x2x32xf32>,
    %c4_i32 = arith.constant 4 : i32
    %102 = arith.index_cast %c4_i32 : i32 to index
    %c0_30 = arith.constant 0 : index
    %c0_31 = arith.constant 0 : index
    %103 = vector.load %arg1[%102, %c0_30, %c0_31] : memref<8x2x128xf32, #tpu.memory_space<vmem>>, vector<1x2x128xf32>
    %104 = vector.shape_cast %103 : vector<1x2x128xf32> to vector<2x128xf32>
    %cst_32 = arith.constant dense<0.000000e+00> : vector<2x128xf32>
    %105 = tpu.matmul %97, %3, %cst_32 {dimension_numbers = #tpu.dot_dimension_numbers<[1], [0], [0], [1], [0, 0, 1, 1], [], []>} : vector<2x32xf32>, vector<32x128xf32>, vector<2x128xf32> -> vector<2x128xf32>
    %106 = arith.addf %104, %105 : vector<2x128xf32>
    %107 = arith.negf %106 : vector<2x128xf32>
    %108 = math.exp %107 : vector<2x128xf32>
    %cst_33 = arith.constant 1.000000e+00 : f32
    %109 = vector.broadcast %cst_33 : f32 to vector<2x128xf32>
    %110 = arith.addf %109, %108 : vector<2x128xf32>
    %111 = arith.divf %109, %110 : vector<2x128xf32>
    %112 = vector.extract_strided_slice %111 {offsets = [0, 0], sizes = [2, 32], strides = [1, 1]} : vector<2x128xf32> to vector<2x32xf32>
    %113 = vector.extract_strided_slice %111 {offsets = [0, 32], sizes = [2, 32], strides = [1, 1]} : vector<2x128xf32> to vector<2x32xf32>
    %114 = vector.extract_strided_slice %111 {offsets = [0, 96], sizes = [2, 32], strides = [1, 1]} : vector<2x128xf32> to vector<2x32xf32>
    %115 = vector.extract_strided_slice %106 {offsets = [0, 64], sizes = [2, 32], strides = [1, 1]} : vector<2x128xf32> to vector<2x32xf32>
    %116 = math.tanh %115 : vector<2x32xf32>
    %117 = arith.mulf %113, %95 : vector<2x32xf32>
    %118 = arith.mulf %112, %116 : vector<2x32xf32>
    %119 = arith.addf %117, %118 : vector<2x32xf32>
    %120 = math.tanh %119 : vector<2x32xf32>
    %121 = arith.mulf %114, %120 : vector<2x32xf32>
    %122 = arith.index_cast %c4_i32 : i32 to index
    %c0_34 = arith.constant 0 : index
    %c0_35 = arith.constant 0 : index
    %123 = vector.load %arg3[%122, %c0_34, %c0_35] : memref<8x2x32xf32, #tpu.memory_space<vmem>>, vector<1x2x32xf32>
    %124 = vector.shape_cast %123 : vector<1x2x32xf32> to vector<2x32xf32>
    %125 = vector.shape_cast %121 : vector<2x32xf32> to vector<1x2x32xf32>
    tpu.vector_store %arg3[%122, %c0_34, %c0_35], %125 {strides = array<i32>} : memref<8x2x32xf32, #tpu.memory_space<vmem>>, vector<1x2x32xf32>,
    %c5_i32 = arith.constant 5 : i32
    %126 = arith.index_cast %c5_i32 : i32 to index
    %c0_36 = arith.constant 0 : index
    %c0_37 = arith.constant 0 : index
    %127 = vector.load %arg1[%126, %c0_36, %c0_37] : memref<8x2x128xf32, #tpu.memory_space<vmem>>, vector<1x2x128xf32>
    %128 = vector.shape_cast %127 : vector<1x2x128xf32> to vector<2x128xf32>
    %cst_38 = arith.constant dense<0.000000e+00> : vector<2x128xf32>
    %129 = tpu.matmul %121, %3, %cst_38 {dimension_numbers = #tpu.dot_dimension_numbers<[1], [0], [0], [1], [0, 0, 1, 1], [], []>} : vector<2x32xf32>, vector<32x128xf32>, vector<2x128xf32> -> vector<2x128xf32>
    %130 = arith.addf %128, %129 : vector<2x128xf32>
    %131 = arith.negf %130 : vector<2x128xf32>
    %132 = math.exp %131 : vector<2x128xf32>
    %cst_39 = arith.constant 1.000000e+00 : f32
    %133 = vector.broadcast %cst_39 : f32 to vector<2x128xf32>
    %134 = arith.addf %133, %132 : vector<2x128xf32>
    %135 = arith.divf %133, %134 : vector<2x128xf32>
    %136 = vector.extract_strided_slice %135 {offsets = [0, 0], sizes = [2, 32], strides = [1, 1]} : vector<2x128xf32> to vector<2x32xf32>
    %137 = vector.extract_strided_slice %135 {offsets = [0, 32], sizes = [2, 32], strides = [1, 1]} : vector<2x128xf32> to vector<2x32xf32>
    %138 = vector.extract_strided_slice %135 {offsets = [0, 96], sizes = [2, 32], strides = [1, 1]} : vector<2x128xf32> to vector<2x32xf32>
    %139 = vector.extract_strided_slice %130 {offsets = [0, 64], sizes = [2, 32], strides = [1, 1]} : vector<2x128xf32> to vector<2x32xf32>
    %140 = math.tanh %139 : vector<2x32xf32>
    %141 = arith.mulf %137, %119 : vector<2x32xf32>
    %142 = arith.mulf %136, %140 : vector<2x32xf32>
    %143 = arith.addf %141, %142 : vector<2x32xf32>
    %144 = math.tanh %143 : vector<2x32xf32>
    %145 = arith.mulf %138, %144 : vector<2x32xf32>
    %146 = arith.index_cast %c5_i32 : i32 to index
    %c0_40 = arith.constant 0 : index
    %c0_41 = arith.constant 0 : index
    %147 = vector.load %arg3[%146, %c0_40, %c0_41] : memref<8x2x32xf32, #tpu.memory_space<vmem>>, vector<1x2x32xf32>
    %148 = vector.shape_cast %147 : vector<1x2x32xf32> to vector<2x32xf32>
    %149 = vector.shape_cast %145 : vector<2x32xf32> to vector<1x2x32xf32>
    tpu.vector_store %arg3[%146, %c0_40, %c0_41], %149 {strides = array<i32>} : memref<8x2x32xf32, #tpu.memory_space<vmem>>, vector<1x2x32xf32>,
    %c6_i32 = arith.constant 6 : i32
    %150 = arith.index_cast %c6_i32 : i32 to index
    %c0_42 = arith.constant 0 : index
    %c0_43 = arith.constant 0 : index
    %151 = vector.load %arg1[%150, %c0_42, %c0_43] : memref<8x2x128xf32, #tpu.memory_space<vmem>>, vector<1x2x128xf32>
    %152 = vector.shape_cast %151 : vector<1x2x128xf32> to vector<2x128xf32>
    %cst_44 = arith.constant dense<0.000000e+00> : vector<2x128xf32>
    %153 = tpu.matmul %145, %3, %cst_44 {dimension_numbers = #tpu.dot_dimension_numbers<[1], [0], [0], [1], [0, 0, 1, 1], [], []>} : vector<2x32xf32>, vector<32x128xf32>, vector<2x128xf32> -> vector<2x128xf32>
    %154 = arith.addf %152, %153 : vector<2x128xf32>
    %155 = arith.negf %154 : vector<2x128xf32>
    %156 = math.exp %155 : vector<2x128xf32>
    %cst_45 = arith.constant 1.000000e+00 : f32
    %157 = vector.broadcast %cst_45 : f32 to vector<2x128xf32>
    %158 = arith.addf %157, %156 : vector<2x128xf32>
    %159 = arith.divf %157, %158 : vector<2x128xf32>
    %160 = vector.extract_strided_slice %159 {offsets = [0, 0], sizes = [2, 32], strides = [1, 1]} : vector<2x128xf32> to vector<2x32xf32>
    %161 = vector.extract_strided_slice %159 {offsets = [0, 32], sizes = [2, 32], strides = [1, 1]} : vector<2x128xf32> to vector<2x32xf32>
    %162 = vector.extract_strided_slice %159 {offsets = [0, 96], sizes = [2, 32], strides = [1, 1]} : vector<2x128xf32> to vector<2x32xf32>
    %163 = vector.extract_strided_slice %154 {offsets = [0, 64], sizes = [2, 32], strides = [1, 1]} : vector<2x128xf32> to vector<2x32xf32>
    %164 = math.tanh %163 : vector<2x32xf32>
    %165 = arith.mulf %161, %143 : vector<2x32xf32>
    %166 = arith.mulf %160, %164 : vector<2x32xf32>
    %167 = arith.addf %165, %166 : vector<2x32xf32>
    %168 = math.tanh %167 : vector<2x32xf32>
    %169 = arith.mulf %162, %168 : vector<2x32xf32>
    %170 = arith.index_cast %c6_i32 : i32 to index
    %c0_46 = arith.constant 0 : index
    %c0_47 = arith.constant 0 : index
    %171 = vector.load %arg3[%170, %c0_46, %c0_47] : memref<8x2x32xf32, #tpu.memory_space<vmem>>, vector<1x2x32xf32>
    %172 = vector.shape_cast %171 : vector<1x2x32xf32> to vector<2x32xf32>
    %173 = vector.shape_cast %169 : vector<2x32xf32> to vector<1x2x32xf32>
    tpu.vector_store %arg3[%170, %c0_46, %c0_47], %173 {strides = array<i32>} : memref<8x2x32xf32, #tpu.memory_space<vmem>>, vector<1x2x32xf32>,
    %c7_i32 = arith.constant 7 : i32
    %174 = arith.index_cast %c7_i32 : i32 to index
    %c0_48 = arith.constant 0 : index
    %c0_49 = arith.constant 0 : index
    %175 = vector.load %arg1[%174, %c0_48, %c0_49] : memref<8x2x128xf32, #tpu.memory_space<vmem>>, vector<1x2x128xf32>
    %176 = vector.shape_cast %175 : vector<1x2x128xf32> to vector<2x128xf32>
    %cst_50 = arith.constant dense<0.000000e+00> : vector<2x128xf32>
    %177 = tpu.matmul %169, %3, %cst_50 {dimension_numbers = #tpu.dot_dimension_numbers<[1], [0], [0], [1], [0, 0, 1, 1], [], []>} : vector<2x32xf32>, vector<32x128xf32>, vector<2x128xf32> -> vector<2x128xf32>
    %178 = arith.addf %176, %177 : vector<2x128xf32>
    %179 = arith.negf %178 : vector<2x128xf32>
    %180 = math.exp %179 : vector<2x128xf32>
    %cst_51 = arith.constant 1.000000e+00 : f32
    %181 = vector.broadcast %cst_51 : f32 to vector<2x128xf32>
    %182 = arith.addf %181, %180 : vector<2x128xf32>
    %183 = arith.divf %181, %182 : vector<2x128xf32>
    %184 = vector.extract_strided_slice %183 {offsets = [0, 0], sizes = [2, 32], strides = [1, 1]} : vector<2x128xf32> to vector<2x32xf32>
    %185 = vector.extract_strided_slice %183 {offsets = [0, 32], sizes = [2, 32], strides = [1, 1]} : vector<2x128xf32> to vector<2x32xf32>
    %186 = vector.extract_strided_slice %183 {offsets = [0, 96], sizes = [2, 32], strides = [1, 1]} : vector<2x128xf32> to vector<2x32xf32>
    %187 = vector.extract_strided_slice %178 {offsets = [0, 64], sizes = [2, 32], strides = [1, 1]} : vector<2x128xf32> to vector<2x32xf32>
    %188 = math.tanh %187 : vector<2x32xf32>
    %189 = arith.mulf %185, %167 : vector<2x32xf32>
    %190 = arith.mulf %184, %188 : vector<2x32xf32>
    %191 = arith.addf %189, %190 : vector<2x32xf32>
    %192 = math.tanh %191 : vector<2x32xf32>
    %193 = arith.mulf %186, %192 : vector<2x32xf32>
    %194 = arith.index_cast %c7_i32 : i32 to index
    %c0_52 = arith.constant 0 : index
    %c0_53 = arith.constant 0 : index
    %195 = vector.load %arg3[%194, %c0_52, %c0_53] : memref<8x2x32xf32, #tpu.memory_space<vmem>>, vector<1x2x32xf32>
    %196 = vector.shape_cast %195 : vector<1x2x32xf32> to vector<2x32xf32>
    %197 = vector.shape_cast %193 : vector<2x32xf32> to vector<1x2x32xf32>
    tpu.vector_store %arg3[%194, %c0_52, %c0_53], %197 {strides = array<i32>} : memref<8x2x32xf32, #tpu.memory_space<vmem>>, vector<1x2x32xf32>,
    %c8_i32 = arith.constant 8 : i32
    %c0_54 = arith.constant 0 : index
    %c0_55 = arith.constant 0 : index
    %198 = vector.load %arg5[%c0_54, %c0_55] : memref<2x32xf32, #tpu.memory_space<vmem>>, vector<2x32xf32>
    tpu.vector_store %arg5[%c0_54, %c0_55], %193 {strides = array<i32>} : memref<2x32xf32, #tpu.memory_space<vmem>>, vector<2x32xf32>,
    %c0_56 = arith.constant 0 : index
    %c0_57 = arith.constant 0 : index
    %199 = vector.load %arg6[%c0_56, %c0_57] : memref<2x32xf32, #tpu.memory_space<vmem>>, vector<2x32xf32>
    tpu.vector_store %arg6[%c0_56, %c0_57], %191 {strides = array<i32>} : memref<2x32xf32, #tpu.memory_space<vmem>>, vector<2x32xf32>,
    %c0_i32_58 = arith.constant 0 : i32
    %200 = arith.cmpi eq, %arg0, %c0_i32_58 : i32
    %201 = arith.extui %200 : i1 to i32
    %c0_i32_59 = arith.constant 0 : i32
    %202 = arith.cmpi ne, %201, %c0_i32_59 : i32
    scf.if %202 {
      %c0_60 = arith.constant 0 : index
      %c0_61 = arith.constant 0 : index
      %203 = vector.load %arg4[%c0_60, %c0_61] : memref<2x32xf32, #tpu.memory_space<vmem>>, vector<2x32xf32>
      tpu.vector_store %arg4[%c0_60, %c0_61], %191 {strides = array<i32>} : memref<2x32xf32, #tpu.memory_space<vmem>>, vector<2x32xf32>,
    } else {
    }
    return
  }
  func.func @transform_0(%arg0: i32) -> (i32, i32, i32) {
    %c0_i32 = arith.constant 0 : i32
    %c0_i32_0 = arith.constant 0 : i32
    %c0_i32_1 = arith.constant 0 : i32
    return %arg0, %c0_i32, %c0_i32_0 : i32, i32, i32
  }
  func.func @transform_1(%arg0: i32) -> (i32, i32) {
    %c0_i32 = arith.constant 0 : i32
    %c0_i32_0 = arith.constant 0 : i32
    %c0_i32_1 = arith.constant 0 : i32
    return %c0_i32, %c0_i32_0 : i32, i32
  }
  func.func @transform_2(%arg0: i32) -> (i32, i32, i32) {
    %c0_i32 = arith.constant 0 : i32
    %c0_i32_0 = arith.constant 0 : i32
    %c0_i32_1 = arith.constant 0 : i32
    return %arg0, %c0_i32, %c0_i32_0 : i32, i32, i32
  }
  func.func @transform_3(%arg0: i32) -> (i32, i32) {
    %c0_i32 = arith.constant 0 : i32
    %c0_i32_0 = arith.constant 0 : i32
    %c0_i32_1 = arith.constant 0 : i32
    return %c0_i32, %c0_i32_0 : i32, i32
  }
}

</mosaic_0001>

<llo_original>
// kernel: protein_lstm_layer.1
$region0: #{protein_lstm_layer.1}
  #allocation0 [shape = 'u32[]', space=smem, size = 0x4, offset = 0x4, fixed_abs, tag = 'smem constant byte address 0x4 - core index']
  #allocation1 [shape = 'u32[144,128]{1,0:T(1,128)}', space=vmem, size = 0x12000, scoped, tag = 'internal scratch']
  #allocation2 [shape = 'f32[2,32]{1,0:T(2,128)}', space=vmem, size = 0x400, scoped, tag = 'scratch operand']
  #allocation3 [shape = 'f32[2,32]{1,0:T(2,128)}', space=vmem, size = 0x400, scoped, tag = 'scratch operand']
  %s0 = inlined_call_operand.vmem [shape: f32[8,2,128], index: 0, kind: input, shape index: {}]
  %s1 = inlined_call_operand.vmem [shape: f32[32,128], index: 1, kind: input, shape index: {}]
  %s2 = inlined_call_operand.vmem [shape: f32[8,2,32], index: 2, kind: output, shape index: {0}]
  %s3 = inlined_call_operand.hbm [shape: f32[2,32], index: 3, kind: output, shape index: {1}]
  %4 = xla_tuple %s2, %s3
  %s5 = sld [smem:[#allocation0]]
  $region34: #{protein_lstm_layer.1} parent=0
    _
  %s7 = ssub.s32 1, %s5
  %s8 = scalar_select 0, %s7, %s5
  $region1: #{protein_lstm_layer.1} parent=0
    #allocation4 [shape = 'u8[1024]{0}', space=vmem, size = 0x400, scoped, tag = 'output window, operand 1, single buffered']
    #allocation5 [shape = 's32[1]{0}', space=sflag, size = 0x4, scoped, tag = 'scoped memory for protein_lstm_layer.1']
    %9 = vsyncpa [#allocation5], 0
    // Predicated region
    $region2: #{protein_lstm_layer.1} parent=1 // pred_check
      _
    $region3: #{protein_lstm_layer.1} parent=1 // pred_check_branch
      %11 = sbr.rel (0) target = $region5
    $region4: #{protein_lstm_layer.1} parent=1 // pred_region
      _
    $region5: #{protein_lstm_layer.1} parent=1 // pred_fallthru
      _
    // Predicated region
    $region6: #{protein_lstm_layer.1} parent=1 // pred_check
      _
    $region7: #{protein_lstm_layer.1} parent=1 // pred_check_branch
      %13 = sbr.rel (0) target = $region9
    $region8: #{protein_lstm_layer.1} parent=1 // pred_region
      _
    $region9: #{protein_lstm_layer.1} parent=1 // pred_fallthru
      _
    %p14 = scmp.eq.s32.totalorder 0, 0
    // Predicated region
    $region10: #{protein_lstm_layer.1} parent=1 // pred_check
      %p15 = pneg %p14
    $region11: #{protein_lstm_layer.1} parent=1 // pred_check_branch
      %17 = sbr.rel (%p15) target = $region13
    $region12: #{protein_lstm_layer.1} parent=1 // pred_region
      %vm18 = vcmask 254976
      %19 = vst.msk [vmem:[#allocation2] sm:$0x3] %vm18, 0.0
      %20 = vst.msk [vmem:[#allocation3] sm:$0x3] %vm18, 0.0
    $region13: #{protein_lstm_layer.1} parent=1 // pred_fallthru
      _
    %v21 = vld [vmem:[%s1] sm:$0xff]
    %v22 = vld [vmem:[%s1 + $0x8] sm:$0xff]
    %v23 = vld [vmem:[%s1 + $0x10] sm:$0xff]
    %v24 = vld [vmem:[%s1 + $0x18] sm:$0xff]
    %v25 = vld [vmem:[#allocation2] sm:$0x3]
    %v26 = vld [vmem:[#allocation3] sm:$0x3]
    %v27 = vld [vmem:[%s0] sm:$0x3]
    %vm28 = vcmask 261120
    %v30 = vsel %vm28, %v25, 0
    %32 = vmatprep.subr.mxu0 0.0
    %33 = vmatpush1.msra.mxu0 %v21
    %34 = vmatprep.subr.mxu0 0.0
    %35 = vmatpush1.msra.mxu0 %v22
    %36 = vmatprep.subr.mxu0 0.0
    %37 = vmatpush1.msra.mxu0 %v23
    %38 = vmatprep.subr.mxu0 0.0
    %39 = vmatpush1.msra.mxu0 %v24
    %40 = vmatprep.subr.mxu0 0.0
    %41 = vmatpush1.msra.mxu0 0.0
    %42 = vmatprep.subr.mxu0 0.0
    %43 = vmatpush1.msra.mxu0 0.0
    %44 = vmatprep.subr.mxu0 0.0
    %45 = vmatpush1.msra.mxu0 0.0
    %46 = vmatprep.subr.mxu0 0.0
    %47 = vmatpush1.msra.mxu0 0.0
    %48 = vmatprep.subr.mxu0 0.0
    %49 = vmatpush1.msra.mxu0 0.0
    %50 = vmatprep.subr.mxu0 0.0
    %51 = vmatpush1.msra.mxu0 0.0
    %52 = vmatprep.subr.mxu0 0.0
    %53 = vmatpush1.msra.mxu0 0.0
    %54 = vmatprep.subr.mxu0 0.0
    %55 = vmatpush1.msra.mxu0 0.0
    %56 = vmatprep.subr.mxu0 0.0
    %57 = vmatpush1.msra.mxu0 0.0
    %58 = vmatprep.subr.mxu0 0.0
    %59 = vmatpush1.msra.mxu0 0.0
    %60 = vmatprep.subr.mxu0 0.0
    %61 = vmatpush1.msra.mxu0 0.0
    %62 = vmatprep.subr.mxu0 0.0
    %63 = vmatpush1.msra.mxu0 0.0
    %64 = vmatprep.subr.mxu0 0.0
    %65 = vmatpush1.msra.mxu0 0.0
    %66 = vmatprep.subr.mxu0 0.0
    %67 = vmatpush1.msra.mxu0 0.0
    %68 = vmatprep.subr.mxu0 0.0
    %69 = vmatpush1.msra.mxu0 0.0
    %70 = vmatprep.subr.mxu0 0.0
    %71 = vmatpush1.msra.mxu0 0.0
    %72 = vmatprep.subr.mxu0 0.0
    %73 = vmatpush1.msra.mxu0 0.0
    %74 = vmatprep.subr.mxu0 0.0
    %75 = vmatpush1.msra.mxu0 0.0
    %76 = vmatprep.subr.mxu0 0.0
    %77 = vmatpush1.msra.mxu0 0.0
    %78 = vmatprep.subr.mxu0 0.0
    %79 = vmatpush1.msra.mxu0 0.0
    %80 = vmatprep.subr.mxu0 0.0
    %81 = vmatpush1.msra.mxu0 0.0
    %82 = vmatprep.subr.mxu0 0.0
    %83 = vmatpush1.msra.mxu0 0.0
    %84 = vmatprep.subr.mxu0 0.0
    %85 = vmatpush1.msra.mxu0 0.0
    %86 = vmatprep.subr.mxu0 0.0
    %87 = vmatpush1.msra.mxu0 0.0
    %88 = vmatprep.subr.mxu0 0.0
    %89 = vmatpush1.msra.mxu0 0.0
    %90 = vmatprep.subr.mxu0 0.0
    %91 = vmatpush1.msra.mxu0 0.0
    %92 = vmatprep.subr.mxu0 0.0
    %93 = vmatpush1.msra.mxu0 0.0
    %94 = vmatprep.subr.mxu0 0.0
    %95 = vmatpush1.msra.mxu0 0.0
    %96 = vmatprep.mubr.f32.mxu0 0.0
    %97 = vmatmul.mubr.f32.gmra.mrb[0].mxu0 %v30
    %v98 = vpop.f32.mrb[0].mxu0
    %v99 = vadd.f32 0.0, %v98
    %v100 = vpop.f32.mrb[0].mxu0
    %101 = vdwg.mxu0
    %v102 = vadd.f32 %v27, %v99
    %v103 = vxor.u32 %v102, 2147483648
    %v104 = vmul.f32 %v103, 1.442695
    %v105 = vpow.pop %v104
    %v106 = vadd.f32 %v105, 1.0
    %v107 = vrcp.pop %v106
    %v108 = vmul.f32 1.0, %v107
    %v109 = vtanh.pop %v102
    %111 = vrot.lane.b32.xlu0 %v26, 32
    %v112 = vpop.permute.xlu0 %111
    %v114 = vmul.f32 %v108, %v112
    %116 = vrot.lane.b32.xlu0 %v109, 64
    %v117 = vpop.permute.xlu0 %116
    %v119 = vmul.f32 %v108, %v117
    %121 = vrot.lane.b32.xlu0 %v119, 32
    %v122 = vpop.permute.xlu0 %121
    %v124 = vadd.f32 %v114, %v122
    %v125 = vtanh.pop %v124
    %127 = vrot.lane.b32.xlu0 %v125, 64
    %v128 = vpop.permute.xlu0 %127
    %v130 = vmul.f32 %v108, %v128
    %132 = vrot.lane.b32.xlu0 %v130, 32
    %v133 = vpop.permute.xlu0 %132
    %vm135 = vcmask 254976
    %136 = vst.msk [vmem:[%s2] sm:$0x3] %vm135, %v133
    %s137 = scalar_lea.vmem %s0, 2
    %v138 = vld [vmem:[%s137] sm:$0x3]
    %v139 = vsel %vm28, %v133, 0
    %141 = vmatprep.subr.mxu0 0.0
    %142 = vmatpush1.msra.mxu0 %v21
    %143 = vmatprep.subr.mxu0 0.0
    %144 = vmatpush1.msra.mxu0 %v22
    %145 = vmatprep.subr.mxu0 0.0
    %146 = vmatpush1.msra.mxu0 %v23
    %147 = vmatprep.subr.mxu0 0.0
    %148 = vmatpush1.msra.mxu0 %v24
    %149 = vmatprep.subr.mxu0 0.0
    %150 = vmatpush1.msra.mxu0 0.0
    %151 = vmatprep.subr.mxu0 0.0
    %152 = vmatpush1.msra.mxu0 0.0
    %153 = vmatprep.subr.mxu0 0.0
    %154 = vmatpush1.msra.mxu0 0.0
    %155 = vmatprep.subr.mxu0 0.0
    %156 = vmatpush1.msra.mxu0 0.0
    %157 = vmatprep.subr.mxu0 0.0
    %158 = vmatpush1.msra.mxu0 0.0
    %159 = vmatprep.subr.mxu0 0.0
    %160 = vmatpush1.msra.mxu0 0.0
    %161 = vmatprep.subr.mxu0 0.0
    %162 = vmatpush1.msra.mxu0 0.0
    %163 = vmatprep.subr.mxu0 0.0
    %164 = vmatpush1.msra.mxu0 0.0
    %165 = vmatprep.subr.mxu0 0.0
    %166 = vmatpush1.msra.mxu0 0.0
    %167 = vmatprep.subr.mxu0 0.0
    %168 = vmatpush1.msra.mxu0 0.0
    %169 = vmatprep.subr.mxu0 0.0
    %170 = vmatpush1.msra.mxu0 0.0
    %171 = vmatprep.subr.mxu0 0.0
    %172 = vmatpush1.msra.mxu0 0.0
    %173 = vmatprep.subr.mxu0 0.0
    %174 = vmatpush1.msra.mxu0 0.0
    %175 = vmatprep.subr.mxu0 0.0
    %176 = vmatpush1.msra.mxu0 0.0
    %177 = vmatprep.subr.mxu0 0.0
    %178 = vmatpush1.msra.mxu0 0.0
    %179 = vmatprep.subr.mxu0 0.0
    %180 = vmatpush1.msra.mxu0 0.0
    %181 = vmatprep.subr.mxu0 0.0
    %182 = vmatpush1.msra.mxu0 0.0
    %183 = vmatprep.subr.mxu0 0.0
    %184 = vmatpush1.msra.mxu0 0.0
    %185 = vmatprep.subr.mxu0 0.0
    %186 = vmatpush1.msra.mxu0 0.0
    %187 = vmatprep.subr.mxu0 0.0
    %188 = vmatpush1.msra.mxu0 0.0
    %189 = vmatprep.subr.mxu0 0.0
    %190 = vmatpush1.msra.mxu0 0.0
    %191 = vmatprep.subr.mxu0 0.0
    %192 = vmatpush1.msra.mxu0 0.0
    %193 = vmatprep.subr.mxu0 0.0
    %194 = vmatpush1.msra.mxu0 0.0
    %195 = vmatprep.subr.mxu0 0.0
    %196 = vmatpush1.msra.mxu0 0.0
    %197 = vmatprep.subr.mxu0 0.0
    %198 = vmatpush1.msra.mxu0 0.0
    %199 = vmatprep.subr.mxu0 0.0
    %200 = vmatpush1.msra.mxu0 0.0
    %201 = vmatprep.subr.mxu0 0.0
    %202 = vmatpush1.msra.mxu0 0.0
    %203 = vmatprep.subr.mxu0 0.0
    %204 = vmatpush1.msra.mxu0 0.0
    %205 = vmatprep.mubr.f32.mxu0 0.0
    %206 = vmatmul.mubr.f32.gmra.mrb[0].mxu0 %v139
    %v207 = vpop.f32.mrb[0].mxu0
    %v208 = vadd.f32 0.0, %v207
    %v209 = vpop.f32.mrb[0].mxu0
    %210 = vdwg.mxu0
    %v211 = vadd.f32 %v138, %v208
    %v212 = vxor.u32 %v211, 2147483648
    %v213 = vmul.f32 %v212, 1.442695
    %v214 = vpow.pop %v213
    %v215 = vadd.f32 %v214, 1.0
    %v216 = vrcp.pop %v215
    %v217 = vmul.f32 1.0, %v216
    %v218 = vtanh.pop %v211
    %v219 = vmul.f32 %v217, %v124
    %221 = vrot.lane.b32.xlu0 %v218, 64
    %v222 = vpop.permute.xlu0 %221
    %v224 = vmul.f32 %v217, %v222
    %226 = vrot.lane.b32.xlu0 %v224, 32
    %v227 = vpop.permute.xlu0 %226
    %v229 = vadd.f32 %v219, %v227
    %v230 = vtanh.pop %v229
    %232 = vrot.lane.b32.xlu0 %v230, 64
    %v233 = vpop.permute.xlu0 %232
    %v235 = vmul.f32 %v217, %v233
    %237 = vrot.lane.b32.xlu0 %v235, 32
    %v238 = vpop.permute.xlu0 %237
    %s240 = scalar_lea.vmem %s2, 2
    %241 = vst.msk [vmem:[%s240] sm:$0x3] %vm135, %v238
    %s242 = scalar_lea.vmem %s0, 4
    %v243 = vld [vmem:[%s242] sm:$0x3]
    %v244 = vsel %vm28, %v238, 0
    %246 = vmatprep.subr.mxu0 0.0
    %247 = vmatpush1.msra.mxu0 %v21
    %248 = vmatprep.subr.mxu0 0.0
    %249 = vmatpush1.msra.mxu0 %v22
    %250 = vmatprep.subr.mxu0 0.0
    %251 = vmatpush1.msra.mxu0 %v23
    %252 = vmatprep.subr.mxu0 0.0
    %253 = vmatpush1.msra.mxu0 %v24
    %254 = vmatprep.subr.mxu0 0.0
    %255 = vmatpush1.msra.mxu0 0.0
    %256 = vmatprep.subr.mxu0 0.0
    %257 = vmatpush1.msra.mxu0 0.0
    %258 = vmatprep.subr.mxu0 0.0
    %259 = vmatpush1.msra.mxu0 0.0
    %260 = vmatprep.subr.mxu0 0.0
    %261 = vmatpush1.msra.mxu0 0.0
    %262 = vmatprep.subr.mxu0 0.0
    %263 = vmatpush1.msra.mxu0 0.0
    %264 = vmatprep.subr.mxu0 0.0
    %265 = vmatpush1.msra.mxu0 0.0
    %266 = vmatprep.subr.mxu0 0.0
    %267 = vmatpush1.msra.mxu0 0.0
    %268 = vmatprep.subr.mxu0 0.0
    %269 = vmatpush1.msra.mxu0 0.0
    %270 = vmatprep.subr.mxu0 0.0
    %271 = vmatpush1.msra.mxu0 0.0
    %272 = vmatprep.subr.mxu0 0.0
    %273 = vmatpush1.msra.mxu0 0.0
    %274 = vmatprep.subr.mxu0 0.0
    %275 = vmatpush1.msra.mxu0 0.0
    %276 = vmatprep.subr.mxu0 0.0
    %277 = vmatpush1.msra.mxu0 0.0
    %278 = vmatprep.subr.mxu0 0.0
    %279 = vmatpush1.msra.mxu0 0.0
    %280 = vmatprep.subr.mxu0 0.0
    %281 = vmatpush1.msra.mxu0 0.0
    %282 = vmatprep.subr.mxu0 0.0
    %283 = vmatpush1.msra.mxu0 0.0
    %284 = vmatprep.subr.mxu0 0.0
    %285 = vmatpush1.msra.mxu0 0.0
    %286 = vmatprep.subr.mxu0 0.0
    %287 = vmatpush1.msra.mxu0 0.0
    %288 = vmatprep.subr.mxu0 0.0
    %289 = vmatpush1.msra.mxu0 0.0
    %290 = vmatprep.subr.mxu0 0.0
    %291 = vmatpush1.msra.mxu0 0.0
    %292 = vmatprep.subr.mxu0 0.0
    %293 = vmatpush1.msra.mxu0 0.0
    %294 = vmatprep.subr.mxu0 0.0
    %295 = vmatpush1.msra.mxu0 0.0
    %296 = vmatprep.subr.mxu0 0.0
    %297 = vmatpush1.msra.mxu0 0.0
    %298 = vmatprep.subr.mxu0 0.0
    %299 = vmatpush1.msra.mxu0 0.0
    %300 = vmatprep.subr.mxu0 0.0
    %301 = vmatpush1.msra.mxu0 0.0
    %302 = vmatprep.subr.mxu0 0.0
    %303 = vmatpush1.msra.mxu0 0.0
    %304 = vmatprep.subr.mxu0 0.0
    %305 = vmatpush1.msra.mxu0 0.0
    %306 = vmatprep.subr.mxu0 0.0
    %307 = vmatpush1.msra.mxu0 0.0
    %308 = vmatprep.subr.mxu0 0.0
    %309 = vmatpush1.msra.mxu0 0.0
    %310 = vmatprep.mubr.f32.mxu0 0.0
    %311 = vmatmul.mubr.f32.gmra.mrb[0].mxu0 %v244
    %v312 = vpop.f32.mrb[0].mxu0
    %v313 = vadd.f32 0.0, %v312
    %v314 = vpop.f32.mrb[0].mxu0
    %315 = vdwg.mxu0
    %v316 = vadd.f32 %v243, %v313
    %v317 = vxor.u32 %v316, 2147483648
    %v318 = vmul.f32 %v317, 1.442695
    %v319 = vpow.pop %v318
    %v320 = vadd.f32 %v319, 1.0
    %v321 = vrcp.pop %v320
    %v322 = vmul.f32 1.0, %v321
    %v323 = vtanh.pop %v316
    %v324 = vmul.f32 %v322, %v229
    %326 = vrot.lane.b32.xlu0 %v323, 64
    %v327 = vpop.permute.xlu0 %326
    %v329 = vmul.f32 %v322, %v327
    %331 = vrot.lane.b32.xlu0 %v329, 32
    %v332 = vpop.permute.xlu0 %331
    %v334 = vadd.f32 %v324, %v332
    %v335 = vtanh.pop %v334
    %337 = vrot.lane.b32.xlu0 %v335, 64
    %v338 = vpop.permute.xlu0 %337
    %v340 = vmul.f32 %v322, %v338
    %342 = vrot.lane.b32.xlu0 %v340, 32
    %v343 = vpop.permute.xlu0 %342
    %s345 = scalar_lea.vmem %s2, 4
    %346 = vst.msk [vmem:[%s345] sm:$0x3] %vm135, %v343
    %s347 = scalar_lea.vmem %s0, 6
    %v348 = vld [vmem:[%s347] sm:$0x3]
    %v349 = vsel %vm28, %v343, 0
    %351 = vmatprep.subr.mxu0 0.0
    %352 = vmatpush1.msra.mxu0 %v21
    %353 = vmatprep.subr.mxu0 0.0
    %354 = vmatpush1.msra.mxu0 %v22
    %355 = vmatprep.subr.mxu0 0.0
    %356 = vmatpush1.msra.mxu0 %v23
    %357 = vmatprep.subr.mxu0 0.0
    %358 = vmatpush1.msra.mxu0 %v24
    %359 = vmatprep.subr.mxu0 0.0
    %360 = vmatpush1.msra.mxu0 0.0
    %361 = vmatprep.subr.mxu0 0.0
    %362 = vmatpush1.msra.mxu0 0.0
    %363 = vmatprep.subr.mxu0 0.0
    %364 = vmatpush1.msra.mxu0 0.0
    %365 = vmatprep.subr.mxu0 0.0
    %366 = vmatpush1.msra.mxu0 0.0
    %367 = vmatprep.subr.mxu0 0.0
    %368 = vmatpush1.msra.mxu0 0.0
    %369 = vmatprep.subr.mxu0 0.0
    %370 = vmatpush1.msra.mxu0 0.0
    %371 = vmatprep.subr.mxu0 0.0
    %372 = vmatpush1.msra.mxu0 0.0
    %373 = vmatprep.subr.mxu0 0.0
    %374 = vmatpush1.msra.mxu0 0.0
    %375 = vmatprep.subr.mxu0 0.0
    %376 = vmatpush1.msra.mxu0 0.0
    %377 = vmatprep.subr.mxu0 0.0
    %378 = vmatpush1.msra.mxu0 0.0
    %379 = vmatprep.subr.mxu0 0.0
    %380 = vmatpush1.msra.mxu0 0.0
    %381 = vmatprep.subr.mxu0 0.0
    %382 = vmatpush1.msra.mxu0 0.0
    %383 = vmatprep.subr.mxu0 0.0
    %384 = vmatpush1.msra.mxu0 0.0
    %385 = vmatprep.subr.mxu0 0.0
    %386 = vmatpush1.msra.mxu0 0.0
    %387 = vmatprep.subr.mxu0 0.0
    %388 = vmatpush1.msra.mxu0 0.0
    %389 = vmatprep.subr.mxu0 0.0
    %390 = vmatpush1.msra.mxu0 0.0
    %391 = vmatprep.subr.mxu0 0.0
    %392 = vmatpush1.msra.mxu0 0.0
    %393 = vmatprep.subr.mxu0 0.0
    %394 = vmatpush1.msra.mxu0 0.0
    %395 = vmatprep.subr.mxu0 0.0
    %396 = vmatpush1.msra.mxu0 0.0
    %397 = vmatprep.subr.mxu0 0.0
    %398 = vmatpush1.msra.mxu0 0.0
    %399 = vmatprep.subr.mxu0 0.0
    %400 = vmatpush1.msra.mxu0 0.0
    %401 = vmatprep.subr.mxu0 0.0
    %402 = vmatpush1.msra.mxu0 0.0
    %403 = vmatprep.subr.mxu0 0.0
    %404 = vmatpush1.msra.mxu0 0.0
    %405 = vmatprep.subr.mxu0 0.0
    %406 = vmatpush1.msra.mxu0 0.0
    %407 = vmatprep.subr.mxu0 0.0
    %408 = vmatpush1.msra.mxu0 0.0
    %409 = vmatprep.subr.mxu0 0.0
    %410 = vmatpush1.msra.mxu0 0.0
    %411 = vmatprep.subr.mxu0 0.0
    %412 = vmatpush1.msra.mxu0 0.0
    %413 = vmatprep.subr.mxu0 0.0
    %414 = vmatpush1.msra.mxu0 0.0
    %415 = vmatprep.mubr.f32.mxu0 0.0
    %416 = vmatmul.mubr.f32.gmra.mrb[0].mxu0 %v349
    %v417 = vpop.f32.mrb[0].mxu0
    %v418 = vadd.f32 0.0, %v417
    %v419 = vpop.f32.mrb[0].mxu0
    %420 = vdwg.mxu0
    %v421 = vadd.f32 %v348, %v418
    %v422 = vxor.u32 %v421, 2147483648
    %v423 = vmul.f32 %v422, 1.442695
    %v424 = vpow.pop %v423
    %v425 = vadd.f32 %v424, 1.0
    %v426 = vrcp.pop %v425
    %v427 = vmul.f32 1.0, %v426
    %v428 = vtanh.pop %v421
    %v429 = vmul.f32 %v427, %v334
    %431 = vrot.lane.b32.xlu0 %v428, 64
    %v432 = vpop.permute.xlu0 %431
    %v434 = vmul.f32 %v427, %v432
    %436 = vrot.lane.b32.xlu0 %v434, 32
    %v437 = vpop.permute.xlu0 %436
    %v439 = vadd.f32 %v429, %v437
    %v440 = vtanh.pop %v439
    %442 = vrot.lane.b32.xlu0 %v440, 64
    %v443 = vpop.permute.xlu0 %442
    %v445 = vmul.f32 %v427, %v443
    %447 = vrot.lane.b32.xlu0 %v445, 32
    %v448 = vpop.permute.xlu0 %447
    %s450 = scalar_lea.vmem %s2, 6
    %451 = vst.msk [vmem:[%s450] sm:$0x3] %vm135, %v448
    %s452 = scalar_lea.vmem %s0, 8
    %v453 = vld [vmem:[%s452] sm:$0x3]
    %v454 = vsel %vm28, %v448, 0
    %456 = vmatprep.subr.mxu0 0.0
    %457 = vmatpush1.msra.mxu0 %v21
    %458 = vmatprep.subr.mxu0 0.0
    %459 = vmatpush1.msra.mxu0 %v22
    %460 = vmatprep.subr.mxu0 0.0
    %461 = vmatpush1.msra.mxu0 %v23
    %462 = vmatprep.subr.mxu0 0.0
    %463 = vmatpush1.msra.mxu0 %v24
    %464 = vmatprep.subr.mxu0 0.0
    %465 = vmatpush1.msra.mxu0 0.0
    %466 = vmatprep.subr.mxu0 0.0
    %467 = vmatpush1.msra.mxu0 0.0
    %468 = vmatprep.subr.mxu0 0.0
    %469 = vmatpush1.msra.mxu0 0.0
    %470 = vmatprep.subr.mxu0 0.0
    %471 = vmatpush1.msra.mxu0 0.0
    %472 = vmatprep.subr.mxu0 0.0
    %473 = vmatpush1.msra.mxu0 0.0
    %474 = vmatprep.subr.mxu0 0.0
    %475 = vmatpush1.msra.mxu0 0.0
    %476 = vmatprep.subr.mxu0 0.0
    %477 = vmatpush1.msra.mxu0 0.0
    %478 = vmatprep.subr.mxu0 0.0
    %479 = vmatpush1.msra.mxu0 0.0
    %480 = vmatprep.subr.mxu0 0.0
    %481 = vmatpush1.msra.mxu0 0.0
    %482 = vmatprep.subr.mxu0 0.0
    %483 = vmatpush1.msra.mxu0 0.0
    %484 = vmatprep.subr.mxu0 0.0
    %485 = vmatpush1.msra.mxu0 0.0
    %486 = vmatprep.subr.mxu0 0.0
    %487 = vmatpush1.msra.mxu0 0.0
    %488 = vmatprep.subr.mxu0 0.0
    %489 = vmatpush1.msra.mxu0 0.0
    %490 = vmatprep.subr.mxu0 0.0
    %491 = vmatpush1.msra.mxu0 0.0
    %492 = vmatprep.subr.mxu0 0.0
    %493 = vmatpush1.msra.mxu0 0.0
    %494 = vmatprep.subr.mxu0 0.0
    %495 = vmatpush1.msra.mxu0 0.0
    %496 = vmatprep.subr.mxu0 0.0
    %497 = vmatpush1.msra.mxu0 0.0
    %498 = vmatprep.subr.mxu0 0.0
    %499 = vmatpush1.msra.mxu0 0.0
    %500 = vmatprep.subr.mxu0 0.0
    %501 = vmatpush1.msra.mxu0 0.0
    %502 = vmatprep.subr.mxu0 0.0
    %503 = vmatpush1.msra.mxu0 0.0
    %504 = vmatprep.subr.mxu0 0.0
    %505 = vmatpush1.msra.mxu0 0.0
    %506 = vmatprep.subr.mxu0 0.0
    %507 = vmatpush1.msra.mxu0 0.0
    %508 = vmatprep.subr.mxu0 0.0
    %509 = vmatpush1.msra.mxu0 0.0
    %510 = vmatprep.subr.mxu0 0.0
    %511 = vmatpush1.msra.mxu0 0.0
    %512 = vmatprep.subr.mxu0 0.0
    %513 = vmatpush1.msra.mxu0 0.0
    %514 = vmatprep.subr.mxu0 0.0
    %515 = vmatpush1.msra.mxu0 0.0
    %516 = vmatprep.subr.mxu0 0.0
    %517 = vmatpush1.msra.mxu0 0.0
    %518 = vmatprep.subr.mxu0 0.0
    %519 = vmatpush1.msra.mxu0 0.0
    %520 = vmatprep.mubr.f32.mxu0 0.0
    %521 = vmatmul.mubr.f32.gmra.mrb[0].mxu0 %v454
    %v522 = vpop.f32.mrb[0].mxu0
    %v523 = vadd.f32 0.0, %v522
    %v524 = vpop.f32.mrb[0].mxu0
    %525 = vdwg.mxu0
    %v526 = vadd.f32 %v453, %v523
    %v527 = vxor.u32 %v526, 2147483648
    %v528 = vmul.f32 %v527, 1.442695
    %v529 = vpow.pop %v528
    %v530 = vadd.f32 %v529, 1.0
    %v531 = vrcp.pop %v530
    %v532 = vmul.f32 1.0, %v531
    %v533 = vtanh.pop %v526
    %v534 = vmul.f32 %v532, %v439
    %536 = vrot.lane.b32.xlu0 %v533, 64
    %v537 = vpop.permute.xlu0 %536
    %v539 = vmul.f32 %v532, %v537
    %541 = vrot.lane.b32.xlu0 %v539, 32
    %v542 = vpop.permute.xlu0 %541
    %v544 = vadd.f32 %v534, %v542
    %v545 = vtanh.pop %v544
    %547 = vrot.lane.b32.xlu0 %v545, 64
    %v548 = vpop.permute.xlu0 %547
    %v550 = vmul.f32 %v532, %v548
    %552 = vrot.lane.b32.xlu0 %v550, 32
    %v553 = vpop.permute.xlu0 %552
    %s555 = scalar_lea.vmem %s2, 8
    %556 = vst.msk [vmem:[%s555] sm:$0x3] %vm135, %v553
    %s557 = scalar_lea.vmem %s0, 10
    %v558 = vld [vmem:[%s557] sm:$0x3]
    %v559 = vsel %vm28, %v553, 0
    %561 = vmatprep.subr.mxu0 0.0
    %562 = vmatpush1.msra.mxu0 %v21
    %563 = vmatprep.subr.mxu0 0.0
    %564 = vmatpush1.msra.mxu0 %v22
    %565 = vmatprep.subr.mxu0 0.0
    %566 = vmatpush1.msra.mxu0 %v23
    %567 = vmatprep.subr.mxu0 0.0
    %568 = vmatpush1.msra.mxu0 %v24
    %569 = vmatprep.subr.mxu0 0.0
    %570 = vmatpush1.msra.mxu0 0.0
    %571 = vmatprep.subr.mxu0 0.0
    %572 = vmatpush1.msra.mxu0 0.0
    %573 = vmatprep.subr.mxu0 0.0
    %574 = vmatpush1.msra.mxu0 0.0
    %575 = vmatprep.subr.mxu0 0.0
    %576 = vmatpush1.msra.mxu0 0.0
    %577 = vmatprep.subr.mxu0 0.0
    %578 = vmatpush1.msra.mxu0 0.0
    %579 = vmatprep.subr.mxu0 0.0
    %580 = vmatpush1.msra.mxu0 0.0
    %581 = vmatprep.subr.mxu0 0.0
    %582 = vmatpush1.msra.mxu0 0.0
    %583 = vmatprep.subr.mxu0 0.0
    %584 = vmatpush1.msra.mxu0 0.0
    %585 = vmatprep.subr.mxu0 0.0
    %586 = vmatpush1.msra.mxu0 0.0
    %587 = vmatprep.subr.mxu0 0.0
    %588 = vmatpush1.msra.mxu0 0.0
    %589 = vmatprep.subr.mxu0 0.0
    %590 = vmatpush1.msra.mxu0 0.0
    %591 = vmatprep.subr.mxu0 0.0
    %592 = vmatpush1.msra.mxu0 0.0
    %593 = vmatprep.subr.mxu0 0.0
    %594 = vmatpush1.msra.mxu0 0.0
    %595 = vmatprep.subr.mxu0 0.0
    %596 = vmatpush1.msra.mxu0 0.0
    %597 = vmatprep.subr.mxu0 0.0
    %598 = vmatpush1.msra.mxu0 0.0
    %599 = vmatprep.subr.mxu0 0.0
    %600 = vmatpush1.msra.mxu0 0.0
    %601 = vmatprep.subr.mxu0 0.0
    %602 = vmatpush1.msra.mxu0 0.0
    %603 = vmatprep.subr.mxu0 0.0
    %604 = vmatpush1.msra.mxu0 0.0
    %605 = vmatprep.subr.mxu0 0.0
    %606 = vmatpush1.msra.mxu0 0.0
    %607 = vmatprep.subr.mxu0 0.0
    %608 = vmatpush1.msra.mxu0 0.0
    %609 = vmatprep.subr.mxu0 0.0
    %610 = vmatpush1.msra.mxu0 0.0
    %611 = vmatprep.subr.mxu0 0.0
    %612 = vmatpush1.msra.mxu0 0.0
    %613 = vmatprep.subr.mxu0 0.0
    %614 = vmatpush1.msra.mxu0 0.0
    %615 = vmatprep.subr.mxu0 0.0
    %616 = vmatpush1.msra.mxu0 0.0
    %617 = vmatprep.subr.mxu0 0.0
    %618 = vmatpush1.msra.mxu0 0.0
    %619 = vmatprep.subr.mxu0 0.0
    %620 = vmatpush1.msra.mxu0 0.0
    %621 = vmatprep.subr.mxu0 0.0
    %622 = vmatpush1.msra.mxu0 0.0
    %623 = vmatprep.subr.mxu0 0.0
    %624 = vmatpush1.msra.mxu0 0.0
    %625 = vmatprep.mubr.f32.mxu0 0.0
    %626 = vmatmul.mubr.f32.gmra.mrb[0].mxu0 %v559
    %v627 = vpop.f32.mrb[0].mxu0
    %v628 = vadd.f32 0.0, %v627
    %v629 = vpop.f32.mrb[0].mxu0
    %630 = vdwg.mxu0
    %v631 = vadd.f32 %v558, %v628
    %v632 = vxor.u32 %v631, 2147483648
    %v633 = vmul.f32 %v632, 1.442695
    %v634 = vpow.pop %v633
    %v635 = vadd.f32 %v634, 1.0
    %v636 = vrcp.pop %v635
    %v637 = vmul.f32 1.0, %v636
    %v638 = vtanh.pop %v631
    %v639 = vmul.f32 %v637, %v544
    %641 = vrot.lane.b32.xlu0 %v638, 64
    %v642 = vpop.permute.xlu0 %641
    %v644 = vmul.f32 %v637, %v642
    %646 = vrot.lane.b32.xlu0 %v644, 32
    %v647 = vpop.permute.xlu0 %646
    %v649 = vadd.f32 %v639, %v647
    %v650 = vtanh.pop %v649
    %652 = vrot.lane.b32.xlu0 %v650, 64
    %v653 = vpop.permute.xlu0 %652
    %v655 = vmul.f32 %v637, %v653
    %657 = vrot.lane.b32.xlu0 %v655, 32
    %v658 = vpop.permute.xlu0 %657
    %s660 = scalar_lea.vmem %s2, 10
    %661 = vst.msk [vmem:[%s660] sm:$0x3] %vm135, %v658
    %s662 = scalar_lea.vmem %s0, 12
    %v663 = vld [vmem:[%s662] sm:$0x3]
    %v664 = vsel %vm28, %v658, 0
    %666 = vmatprep.subr.mxu0 0.0
    %667 = vmatpush1.msra.mxu0 %v21
    %668 = vmatprep.subr.mxu0 0.0
    %669 = vmatpush1.msra.mxu0 %v22
    %670 = vmatprep.subr.mxu0 0.0
    %671 = vmatpush1.msra.mxu0 %v23
    %672 = vmatprep.subr.mxu0 0.0
    %673 = vmatpush1.msra.mxu0 %v24
    %674 = vmatprep.subr.mxu0 0.0
    %675 = vmatpush1.msra.mxu0 0.0
    %676 = vmatprep.subr.mxu0 0.0
    %677 = vmatpush1.msra.mxu0 0.0
    %678 = vmatprep.subr.mxu0 0.0
    %679 = vmatpush1.msra.mxu0 0.0
    %680 = vmatprep.subr.mxu0 0.0
    %681 = vmatpush1.msra.mxu0 0.0
    %682 = vmatprep.subr.mxu0 0.0
    %683 = vmatpush1.msra.mxu0 0.0
    %684 = vmatprep.subr.mxu0 0.0
    %685 = vmatpush1.msra.mxu0 0.0
    %686 = vmatprep.subr.mxu0 0.0
    %687 = vmatpush1.msra.mxu0 0.0
    %688 = vmatprep.subr.mxu0 0.0
    %689 = vmatpush1.msra.mxu0 0.0
    %690 = vmatprep.subr.mxu0 0.0
    %691 = vmatpush1.msra.mxu0 0.0
    %692 = vmatprep.subr.mxu0 0.0
    %693 = vmatpush1.msra.mxu0 0.0
    %694 = vmatprep.subr.mxu0 0.0
    %695 = vmatpush1.msra.mxu0 0.0
    %696 = vmatprep.subr.mxu0 0.0
    %697 = vmatpush1.msra.mxu0 0.0
    %698 = vmatprep.subr.mxu0 0.0
    %699 = vmatpush1.msra.mxu0 0.0
    %700 = vmatprep.subr.mxu0 0.0
    %701 = vmatpush1.msra.mxu0 0.0
    %702 = vmatprep.subr.mxu0 0.0
    %703 = vmatpush1.msra.mxu0 0.0
    %704 = vmatprep.subr.mxu0 0.0
    %705 = vmatpush1.msra.mxu0 0.0
    %706 = vmatprep.subr.mxu0 0.0
    %707 = vmatpush1.msra.mxu0 0.0
    %708 = vmatprep.subr.mxu0 0.0
    %709 = vmatpush1.msra.mxu0 0.0
    %710 = vmatprep.subr.mxu0 0.0
    %711 = vmatpush1.msra.mxu0 0.0
    %712 = vmatprep.subr.mxu0 0.0
    %713 = vmatpush1.msra.mxu0 0.0
    %714 = vmatprep.subr.mxu0 0.0
    %715 = vmatpush1.msra.mxu0 0.0
    %716 = vmatprep.subr.mxu0 0.0
    %717 = vmatpush1.msra.mxu0 0.0
    %718 = vmatprep.subr.mxu0 0.0
    %719 = vmatpush1.msra.mxu0 0.0
    %720 = vmatprep.subr.mxu0 0.0
    %721 = vmatpush1.msra.mxu0 0.0
    %722 = vmatprep.subr.mxu0 0.0
    %723 = vmatpush1.msra.mxu0 0.0
    %724 = vmatprep.subr.mxu0 0.0
    %725 = vmatpush1.msra.mxu0 0.0
    %726 = vmatprep.subr.mxu0 0.0
    %727 = vmatpush1.msra.mxu0 0.0
    %728 = vmatprep.subr.mxu0 0.0
    %729 = vmatpush1.msra.mxu0 0.0
    %730 = vmatprep.mubr.f32.mxu0 0.0
    %731 = vmatmul.mubr.f32.gmra.mrb[0].mxu0 %v664
    %v732 = vpop.f32.mrb[0].mxu0
    %v733 = vadd.f32 0.0, %v732
    %v734 = vpop.f32.mrb[0].mxu0
    %735 = vdwg.mxu0
    %v736 = vadd.f32 %v663, %v733
    %v737 = vxor.u32 %v736, 2147483648
    %v738 = vmul.f32 %v737, 1.442695
    %v739 = vpow.pop %v738
    %v740 = vadd.f32 %v739, 1.0
    %v741 = vrcp.pop %v740
    %v742 = vmul.f32 1.0, %v741
    %v743 = vtanh.pop %v736
    %v744 = vmul.f32 %v742, %v649
    %746 = vrot.lane.b32.xlu0 %v743, 64
    %v747 = vpop.permute.xlu0 %746
    %v749 = vmul.f32 %v742, %v747
    %751 = vrot.lane.b32.xlu0 %v749, 32
    %v752 = vpop.permute.xlu0 %751
    %v754 = vadd.f32 %v744, %v752
    %v755 = vtanh.pop %v754
    %757 = vrot.lane.b32.xlu0 %v755, 64
    %v758 = vpop.permute.xlu0 %757
    %v760 = vmul.f32 %v742, %v758
    %762 = vrot.lane.b32.xlu0 %v760, 32
    %v763 = vpop.permute.xlu0 %762
    %s765 = scalar_lea.vmem %s2, 12
    %766 = vst.msk [vmem:[%s765] sm:$0x3] %vm135, %v763
    %s767 = scalar_lea.vmem %s0, 14
    %v768 = vld [vmem:[%s767] sm:$0x3]
    %v769 = vsel %vm28, %v763, 0
    %771 = vmatprep.subr.mxu0 0.0
    %772 = vmatpush1.msra.mxu0 %v21
    %773 = vmatprep.subr.mxu0 0.0
    %774 = vmatpush1.msra.mxu0 %v22
    %775 = vmatprep.subr.mxu0 0.0
    %776 = vmatpush1.msra.mxu0 %v23
    %777 = vmatprep.subr.mxu0 0.0
    %778 = vmatpush1.msra.mxu0 %v24
    %779 = vmatprep.subr.mxu0 0.0
    %780 = vmatpush1.msra.mxu0 0.0
    %781 = vmatprep.subr.mxu0 0.0
    %782 = vmatpush1.msra.mxu0 0.0
    %783 = vmatprep.subr.mxu0 0.0
    %784 = vmatpush1.msra.mxu0 0.0
    %785 = vmatprep.subr.mxu0 0.0
    %786 = vmatpush1.msra.mxu0 0.0
    %787 = vmatprep.subr.mxu0 0.0
    %788 = vmatpush1.msra.mxu0 0.0
    %789 = vmatprep.subr.mxu0 0.0
    %790 = vmatpush1.msra.mxu0 0.0
    %791 = vmatprep.subr.mxu0 0.0
    %792 = vmatpush1.msra.mxu0 0.0
    %793 = vmatprep.subr.mxu0 0.0
    %794 = vmatpush1.msra.mxu0 0.0
    %795 = vmatprep.subr.mxu0 0.0
    %796 = vmatpush1.msra.mxu0 0.0
    %797 = vmatprep.subr.mxu0 0.0
    %798 = vmatpush1.msra.mxu0 0.0
    %799 = vmatprep.subr.mxu0 0.0
    %800 = vmatpush1.msra.mxu0 0.0
    %801 = vmatprep.subr.mxu0 0.0
    %802 = vmatpush1.msra.mxu0 0.0
    %803 = vmatprep.subr.mxu0 0.0
    %804 = vmatpush1.msra.mxu0 0.0
    %805 = vmatprep.subr.mxu0 0.0
    %806 = vmatpush1.msra.mxu0 0.0
    %807 = vmatprep.subr.mxu0 0.0
    %808 = vmatpush1.msra.mxu0 0.0
    %809 = vmatprep.subr.mxu0 0.0
    %810 = vmatpush1.msra.mxu0 0.0
    %811 = vmatprep.subr.mxu0 0.0
    %812 = vmatpush1.msra.mxu0 0.0
    %813 = vmatprep.subr.mxu0 0.0
    %814 = vmatpush1.msra.mxu0 0.0
    %815 = vmatprep.subr.mxu0 0.0
    %816 = vmatpush1.msra.mxu0 0.0
    %817 = vmatprep.subr.mxu0 0.0
    %818 = vmatpush1.msra.mxu0 0.0
    %819 = vmatprep.subr.mxu0 0.0
    %820 = vmatpush1.msra.mxu0 0.0
    %821 = vmatprep.subr.mxu0 0.0
    %822 = vmatpush1.msra.mxu0 0.0
    %823 = vmatprep.subr.mxu0 0.0
    %824 = vmatpush1.msra.mxu0 0.0
    %825 = vmatprep.subr.mxu0 0.0
    %826 = vmatpush1.msra.mxu0 0.0
    %827 = vmatprep.subr.mxu0 0.0
    %828 = vmatpush1.msra.mxu0 0.0
    %829 = vmatprep.subr.mxu0 0.0
    %830 = vmatpush1.msra.mxu0 0.0
    %831 = vmatprep.subr.mxu0 0.0
    %832 = vmatpush1.msra.mxu0 0.0
    %833 = vmatprep.subr.mxu0 0.0
    %834 = vmatpush1.msra.mxu0 0.0
    %835 = vmatprep.mubr.f32.mxu0 0.0
    %836 = vmatmul.mubr.f32.gmra.mrb[0].mxu0 %v769
    %v837 = vpop.f32.mrb[0].mxu0
    %v838 = vadd.f32 0.0, %v837
    %v839 = vpop.f32.mrb[0].mxu0
    %840 = vdwg.mxu0
    %v841 = vadd.f32 %v768, %v838
    %v842 = vxor.u32 %v841, 2147483648
    %v843 = vmul.f32 %v842, 1.442695
    %v844 = vpow.pop %v843
    %v845 = vadd.f32 %v844, 1.0
    %v846 = vrcp.pop %v845
    %v847 = vmul.f32 1.0, %v846
    %v848 = vtanh.pop %v841
    %v849 = vmul.f32 %v847, %v754
    %851 = vrot.lane.b32.xlu0 %v848, 64
    %v852 = vpop.permute.xlu0 %851
    %v854 = vmul.f32 %v847, %v852
    %856 = vrot.lane.b32.xlu0 %v854, 32
    %v857 = vpop.permute.xlu0 %856
    %v859 = vadd.f32 %v849, %v857
    %v860 = vtanh.pop %v859
    %862 = vrot.lane.b32.xlu0 %v860, 64
    %v863 = vpop.permute.xlu0 %862
    %v865 = vmul.f32 %v847, %v863
    %867 = vrot.lane.b32.xlu0 %v865, 32
    %v868 = vpop.permute.xlu0 %867
    %s870 = scalar_lea.vmem %s2, 14
    %871 = vst.msk [vmem:[%s870] sm:$0x3] %vm135, %v868
    %872 = vst.msk [vmem:[#allocation2] sm:$0x3] %vm135, %v868
    %874 = vrot.lane.b32.xlu0 %v859, 96
    %v875 = vpop.permute.xlu0 %874
    %877 = vst.msk [vmem:[#allocation3] sm:$0x3] %vm135, %v875
    // Predicated region
    $region14: #{protein_lstm_layer.1} parent=1 // pred_check
      %p878 = pneg %p14
    $region15: #{protein_lstm_layer.1} parent=1 // pred_check_branch
      %880 = sbr.rel (%p878) target = $region17
    $region16: #{protein_lstm_layer.1} parent=1 // pred_region
      %881 = vst.msk [vmem:[#allocation4] sm:$0x3] %vm135, %v875
    $region17: #{protein_lstm_layer.1} parent=1 // pred_fallthru
      _
    // Predicated region
    $region18: #{protein_lstm_layer.1} parent=1 // pred_check
      _
    $region19: #{protein_lstm_layer.1} parent=1 // pred_check_branch
      %883 = sbr.rel (0) target = $region21
    $region20: #{protein_lstm_layer.1} parent=1 // pred_region
      _
    $region21: #{protein_lstm_layer.1} parent=1 // pred_fallthru
      _
    // Predicated region
    $region22: #{protein_lstm_layer.1} parent=1 // pred_check
      _
    $region23: #{protein_lstm_layer.1} parent=1 // pred_check_branch
      %885 = sbr.rel (0) target = $region25
    $region24: #{protein_lstm_layer.1} parent=1 // pred_region
      %s887 = ssub.s32 32, 32
      %888 = vsyncadd [#allocation5], %s887
      %s890 = sshll.u32 [#allocation4], 4
      %s891 = int_to_ptr.vmem [resolvable:$true] %s890
      %893 = dma.vmem_to_hbm [thread:$0]  %s891, 32, %s3, [#allocation5]
    $region25: #{protein_lstm_layer.1} parent=1 // pred_fallthru
      _
    // Predicated region
    $region26: #{protein_lstm_layer.1} parent=1 // pred_check
      _
    $region27: #{protein_lstm_layer.1} parent=1 // pred_check_branch
      %895 = sbr.rel (0) target = $region29
    $region28: #{protein_lstm_layer.1} parent=1 // pred_region
      _
    $region29: #{protein_lstm_layer.1} parent=1 // pred_fallthru
      _
    // Predicated region
    $region30: #{protein_lstm_layer.1} parent=1 // pred_check
      _
    $region31: #{protein_lstm_layer.1} parent=1 // pred_check_branch
      %897 = sbr.rel (0) target = $region33
    $region32: #{protein_lstm_layer.1} parent=1 // pred_region
      %898 = dma.done [#allocation5], 32
    $region33: #{protein_lstm_layer.1} parent=1 // pred_fallthru
      _
    %899 = vsyncpa [#allocation5], 1

</llo_original>
